<compile_context>
chip_gen: v7x
topology: tpu7x:2x2x1
jax: 0.10.0
libtpu: 0.0.40
codegen_flags: <defaults>
</compile_context>

<pallas_src>
import jax
import jax.numpy as jnp
from jax.experimental import pallas as pl
from jax.experimental.pallas import tpu as pltpu


def _round_up(x, m):
    return (x + m - 1) // m * m


def _decoder_kernel(xt_ref, w1_ref, b1_ref, w2_ref, b2_ref, ot_ref):
    # xt_ref: (L, TB)  batch on lanes
    # w1_ref: (L, L)   PyTorch (out, in) layout
    # b1_ref: (L, 1)
    # w2_ref: (O, L)   PyTorch (out, in) layout
    # b2_ref: (O, 1)
    # ot_ref: (O, TB)  lane-dense output tile
    xt = xt_ref[...]
    w1 = w1_ref[...]
    w2 = w2_ref[...]
    L = xt.shape[0]

    # Layer 1: h[j, b] = sum_i W1[j, i] * x[i, b] + b1[j]
    # Unrolled VPU broadcast FMAs (K = L = 2); the MXU would be ~idle here.
    h = b1_ref[...]                          # (L, 1), broadcast along lanes
    for i in range(L):                       # static unroll
        h = h + w1[:, i:i + 1] * xt[i:i + 1, :]
    h = jnp.maximum(h, 0.0)                  # ReLU

    # Layer 2: o[k, b] = sum_i W2[k, i] * h[i, b] + b2[k]
    o = b2_ref[...]                          # (O, 1)
    for i in range(L):
        o = o + w2[:, i:i + 1] * h[i:i + 1, :]

    ot_ref[...] = o.astype(ot_ref.dtype)


def variational_decoder(features, w1, b1, w2, b2, *, max_block_batch=4096):
    """features: (B, latent_dim) float32.
    w1: (latent_dim, latent_dim)  -- PyTorch (out, in) layout
    b1: (latent_dim,)
    w2: (output_shape, latent_dim) -- PyTorch (out, in) layout
    b2: (output_shape,)
    Returns (B, output_shape) float32.
    """
    B, L = features.shape
    O, L2 = w2.shape
    assert L2 == L and w1.shape == (L, L)

    # Batch tile: multiple of 128 (lane width), as large as reasonable.
    TB = min(max_block_batch, _round_up(B, 128))
    Bp = _round_up(B, TB)

    # Lane-dense layout: batch on lanes.  Pad batch to a tile multiple.
    xt = features.T                                    # (L, B)
    if Bp != B:
        xt = jnp.pad(xt, ((0, 0), (0, Bp - B)))
    b1c = b1.reshape(L, 1).astype(features.dtype)
    b2c = b2.reshape(O, 1).astype(features.dtype)

    grid = (Bp // TB,)

    cost = pl.CostEstimate(
        flops=2 * B * L * L + 2 * B * L * O,
        transcendentals=0,
        bytes_accessed=4 * (B * L + L * L + L + O * L + O + B * O),
    )

    out_t = pl.pallas_call(
        _decoder_kernel,
        out_shape=jax.ShapeDtypeStruct((O, Bp), features.dtype),
        grid_spec=pltpu.PrefetchScalarGridSpec(
            num_scalar_prefetch=0,
            grid=grid,
            in_specs=[
                # activations: tiled over batch (lanes)
                pl.BlockSpec((L, TB), lambda b: (0, b)),
                # weights / biases: VMEM-resident across all grid steps
                pl.BlockSpec((L, L), lambda b: (0, 0)),
                pl.BlockSpec((L, 1), lambda b: (0, 0)),
                pl.BlockSpec((O, L), lambda b: (0, 0)),
                pl.BlockSpec((O, 1), lambda b: (0, 0)),
            ],
            out_specs=pl.BlockSpec((O, TB), lambda b: (0, b)),
        ),
        compiler_params=pltpu.CompilerParams(
            # batch axis is independent -> shard across v7x's 2 TCs
            dimension_semantics=("parallel",),
        ),
        cost_estimate=cost,
    )(xt, w1, b1c, w2, b2c)

    return out_t[:, :B].T


def _reference(features, w1, b1, w2, b2):
    # PyTorch semantics: Linear(x) = x @ W.T + b
    h = jnp.maximum(features @ w1.T + b1, 0.0)
    return h @ w2.T + b2


if __name__ == "__main__":
    # Module defaults: output_shape=5, latent_dim=2.
    LATENT, OUT = 2, 5

    key = jax.random.PRNGKey(0)
    k_x, k_w1, k_b1, k_w2, k_b2 = jax.random.split(key, 5)

    # PyTorch-layout parameters: weight is (out_features, in_features).
    w1 = jax.random.normal(k_w1, (LATENT, LATENT), dtype=jnp.float32) * 0.5
    b1 = jax.random.normal(k_b1, (LATENT,), dtype=jnp.float32) * 0.1
    w2 = jax.random.normal(k_w2, (OUT, LATENT), dtype=jnp.float32) * 0.5
    b2 = jax.random.normal(k_b2, (OUT,), dtype=jnp.float32) * 0.1

    # Small batch matching the module's intent (single grid step, padded to 128 lanes).
    B = 8
    features = jax.random.normal(k_x, (B, LATENT), dtype=jnp.float32)
    out = jax.block_until_ready(variational_decoder(features, w1, b1, w2, b2))
    ref = _reference(features, w1, b1, w2, b2)
    assert out.shape == (B, OUT), out.shape
    assert jnp.allclose(out, ref, atol=1e-5, rtol=1e-5), "mismatch vs reference (B=8)"

    # Second check exercising the multi-step batch grid + padding path.
    B2 = 300
    features2 = jax.random.normal(k_x, (B2, LATENT), dtype=jnp.float32)
    out2 = jax.block_until_ready(
        variational_decoder(features2, w1, b1, w2, b2, max_block_batch=128))
    ref2 = _reference(features2, w1, b1, w2, b2)
    assert out2.shape == (B2, OUT), out2.shape
    assert jnp.allclose(out2, ref2, atol=1e-5, rtol=1e-5), "mismatch vs reference (B=300)"

    print("KERNEL_OK")
</pallas_src>

<mosaic_0001>
module attributes {stable_mosaic.version = 11 : i64} {
  func.func @_decoder_kernel(%arg0: i32, %arg1: memref<2x128xf32, #tpu.memory_space<vmem>>, %arg2: memref<2x2xf32, #tpu.memory_space<vmem>>, %arg3: memref<2x1xf32, #tpu.memory_space<vmem>>, %arg4: memref<5x2xf32, #tpu.memory_space<vmem>>, %arg5: memref<5x1xf32, #tpu.memory_space<vmem>>, %arg6: memref<5x128xf32, #tpu.memory_space<vmem>>) attributes {dimension_semantics = [#tpu.dimension_semantics<parallel>], iteration_bounds = array<i64: 1>, scalar_prefetch = 0 : i64, scratch_operands = 0 : i64, tpu.core_type = #tpu.core_type<tc>, window_params = [{transform_indices = @transform_0, window_bounds = array<i64: 2, 128>}, {pipeline_mode = #tpu.pipeline_mode<synchronous>, transform_indices = @transform_1, window_bounds = array<i64: 2, 2>}, {pipeline_mode = #tpu.pipeline_mode<synchronous>, transform_indices = @transform_2, window_bounds = array<i64: 2, 1>}, {pipeline_mode = #tpu.pipeline_mode<synchronous>, transform_indices = @transform_3, window_bounds = array<i64: 5, 2>}, {pipeline_mode = #tpu.pipeline_mode<synchronous>, transform_indices = @transform_4, window_bounds = array<i64: 5, 1>}, {transform_indices = @transform_5, window_bounds = array<i64: 5, 128>}]} {
    %c0 = arith.constant 0 : index
    %c0_0 = arith.constant 0 : index
    %0 = vector.load %arg1[%c0, %c0_0] : memref<2x128xf32, #tpu.memory_space<vmem>>, vector<2x128xf32>
    %c0_1 = arith.constant 0 : index
    %c0_2 = arith.constant 0 : index
    %1 = vector.load %arg2[%c0_1, %c0_2] : memref<2x2xf32, #tpu.memory_space<vmem>>, vector<2x2xf32>
    %c0_3 = arith.constant 0 : index
    %c0_4 = arith.constant 0 : index
    %2 = vector.load %arg4[%c0_3, %c0_4] : memref<5x2xf32, #tpu.memory_space<vmem>>, vector<5x2xf32>
    %c0_5 = arith.constant 0 : index
    %c0_6 = arith.constant 0 : index
    %3 = vector.load %arg3[%c0_5, %c0_6] : memref<2x1xf32, #tpu.memory_space<vmem>>, vector<2x1xf32>
    %4 = vector.extract_strided_slice %1 {offsets = [0, 0], sizes = [2, 1], strides = [1, 1]} : vector<2x2xf32> to vector<2x1xf32>
    %5 = vector.extract_strided_slice %0 {offsets = [0, 0], sizes = [1, 128], strides = [1, 1]} : vector<2x128xf32> to vector<1x128xf32>
    %6 = vector.broadcast %4 : vector<2x1xf32> to vector<2x128xf32>
    %7 = vector.broadcast %5 : vector<1x128xf32> to vector<2x128xf32>
    %8 = arith.mulf %6, %7 : vector<2x128xf32>
    %9 = vector.broadcast %3 : vector<2x1xf32> to vector<2x128xf32>
    %10 = arith.addf %9, %8 : vector<2x128xf32>
    %11 = vector.extract_strided_slice %1 {offsets = [0, 1], sizes = [2, 1], strides = [1, 1]} : vector<2x2xf32> to vector<2x1xf32>
    %12 = vector.extract_strided_slice %0 {offsets = [1, 0], sizes = [1, 128], strides = [1, 1]} : vector<2x128xf32> to vector<1x128xf32>
    %13 = vector.broadcast %11 : vector<2x1xf32> to vector<2x128xf32>
    %14 = vector.broadcast %12 : vector<1x128xf32> to vector<2x128xf32>
    %15 = arith.mulf %13, %14 : vector<2x128xf32>
    %16 = arith.addf %10, %15 : vector<2x128xf32>
    %cst = arith.constant 0.000000e+00 : f32
    %17 = vector.broadcast %cst : f32 to vector<2x128xf32>
    %18 = arith.maximumf %16, %17 : vector<2x128xf32>
    %c0_7 = arith.constant 0 : index
    %c0_8 = arith.constant 0 : index
    %19 = vector.load %arg5[%c0_7, %c0_8] : memref<5x1xf32, #tpu.memory_space<vmem>>, vector<5x1xf32>
    %20 = vector.extract_strided_slice %2 {offsets = [0, 0], sizes = [5, 1], strides = [1, 1]} : vector<5x2xf32> to vector<5x1xf32>
    %21 = vector.extract_strided_slice %18 {offsets = [0, 0], sizes = [1, 128], strides = [1, 1]} : vector<2x128xf32> to vector<1x128xf32>
    %22 = vector.broadcast %20 : vector<5x1xf32> to vector<5x128xf32>
    %23 = vector.broadcast %21 : vector<1x128xf32> to vector<5x128xf32>
    %24 = arith.mulf %22, %23 : vector<5x128xf32>
    %25 = vector.broadcast %19 : vector<5x1xf32> to vector<5x128xf32>
    %26 = arith.addf %25, %24 : vector<5x128xf32>
    %27 = vector.extract_strided_slice %2 {offsets = [0, 1], sizes = [5, 1], strides = [1, 1]} : vector<5x2xf32> to vector<5x1xf32>
    %28 = vector.extract_strided_slice %18 {offsets = [1, 0], sizes = [1, 128], strides = [1, 1]} : vector<2x128xf32> to vector<1x128xf32>
    %29 = vector.broadcast %27 : vector<5x1xf32> to vector<5x128xf32>
    %30 = vector.broadcast %28 : vector<1x128xf32> to vector<5x128xf32>
    %31 = arith.mulf %29, %30 : vector<5x128xf32>
    %32 = arith.addf %26, %31 : vector<5x128xf32>
    %c0_9 = arith.constant 0 : index
    %c0_10 = arith.constant 0 : index
    %33 = vector.load %arg6[%c0_9, %c0_10] : memref<5x128xf32, #tpu.memory_space<vmem>>, vector<5x128xf32>
    tpu.vector_store %arg6[%c0_9, %c0_10], %32 {strides = array<i32>} : memref<5x128xf32, #tpu.memory_space<vmem>>, vector<5x128xf32>,
    return
  }
  func.func @transform_0(%arg0: i32) -> (i32, i32) {
    %c0_i32 = arith.constant 0 : i32
    %c0_i32_0 = arith.constant 0 : i32
    return %c0_i32, %arg0 : i32, i32
  }
  func.func @transform_1(%arg0: i32) -> (i32, i32) {
    %c0_i32 = arith.constant 0 : i32
    %c0_i32_0 = arith.constant 0 : i32
    %c0_i32_1 = arith.constant 0 : i32
    return %c0_i32, %c0_i32_0 : i32, i32
  }
  func.func @transform_2(%arg0: i32) -> (i32, i32) {
    %c0_i32 = arith.constant 0 : i32
    %c0_i32_0 = arith.constant 0 : i32
    %c0_i32_1 = arith.constant 0 : i32
    return %c0_i32, %c0_i32_0 : i32, i32
  }
  func.func @transform_3(%arg0: i32) -> (i32, i32) {
    %c0_i32 = arith.constant 0 : i32
    %c0_i32_0 = arith.constant 0 : i32
    %c0_i32_1 = arith.constant 0 : i32
    return %c0_i32, %c0_i32_0 : i32, i32
  }
  func.func @transform_4(%arg0: i32) -> (i32, i32) {
    %c0_i32 = arith.constant 0 : i32
    %c0_i32_0 = arith.constant 0 : i32
    %c0_i32_1 = arith.constant 0 : i32
    return %c0_i32, %c0_i32_0 : i32, i32
  }
  func.func @transform_5(%arg0: i32) -> (i32, i32) {
    %c0_i32 = arith.constant 0 : i32
    %c0_i32_0 = arith.constant 0 : i32
    return %c0_i32, %arg0 : i32, i32
  }
}

</mosaic_0001>

<llo_original>
// kernel: tpu_custom_call.1
$region0: #{tpu_custom_call.1}
  #allocation0 [shape = 'u32[]', space=smem, size = 0x4, offset = 0x4, fixed_abs, tag = 'smem constant byte address 0x4 - core index']
  #allocation1 [shape = 'u32[144,128]{1,0:T(1,128)}', space=vmem, size = 0x12000, scoped, tag = 'internal scratch']
  %s0 = inlined_call_operand.vmem [shape: f32[2,128], index: 0, kind: input, shape index: {}]
  %s1 = inlined_call_operand.vmem [shape: f32[2,2], index: 1, kind: input, shape index: {}]
  %s2 = inlined_call_operand.vmem [shape: f32[2,1], index: 2, kind: input, shape index: {}]
  %s3 = inlined_call_operand.vmem [shape: f32[5,2], index: 3, kind: input, shape index: {}]
  %s4 = inlined_call_operand.vmem [shape: f32[5,1], index: 4, kind: input, shape index: {}]
  %s5 = inlined_call_operand.hbm [shape: f32[5,128], index: 5, kind: output, shape index: {}]
  %s6 = sld [smem:[#allocation0]]
  $region30: #{tpu_custom_call.1} parent=0
    _
  %s8 = ssub.s32 1, %s6
  %s9 = scalar_select 0, %s8, %s6
  $region1: #{tpu_custom_call.1} parent=0
    #allocation2 [shape = 'u8[4096]{0}', space=vmem, size = 0x1000, scoped, tag = 'output window, operand 0, single buffered']
    #allocation3 [shape = 's32[1]{0}', space=sflag, size = 0x4, scoped, tag = 'scoped memory for tpu_custom_call.1']
    %10 = vsyncpa [#allocation3], 0
    // Predicated region
    $region2: #{tpu_custom_call.1} parent=1 // pred_check
      _
    $region3: #{tpu_custom_call.1} parent=1 // pred_check_branch
      %12 = sbr.rel (0) target = $region5
    $region4: #{tpu_custom_call.1} parent=1 // pred_region
      _
    $region5: #{tpu_custom_call.1} parent=1 // pred_fallthru
      _
    // Predicated region
    $region6: #{tpu_custom_call.1} parent=1 // pred_check
      _
    $region7: #{tpu_custom_call.1} parent=1 // pred_check_branch
      %14 = sbr.rel (0) target = $region9
    $region8: #{tpu_custom_call.1} parent=1 // pred_region
      _
    $region9: #{tpu_custom_call.1} parent=1 // pred_fallthru
      _
    // Predicated region
    $region10: #{tpu_custom_call.1} parent=1 // pred_check
      _
    $region11: #{tpu_custom_call.1} parent=1 // pred_check_branch
      %16 = sbr.rel (0) target = $region13
    $region12: #{tpu_custom_call.1} parent=1 // pred_region
      _
    $region13: #{tpu_custom_call.1} parent=1 // pred_fallthru
      _
    // Predicated region
    $region14: #{tpu_custom_call.1} parent=1 // pred_check
      _
    $region15: #{tpu_custom_call.1} parent=1 // pred_check_branch
      %18 = sbr.rel (0) target = $region17
    $region16: #{tpu_custom_call.1} parent=1 // pred_region
      _
    $region17: #{tpu_custom_call.1} parent=1 // pred_fallthru
      _
    // Predicated region
    $region18: #{tpu_custom_call.1} parent=1 // pred_check
      _
    $region19: #{tpu_custom_call.1} parent=1 // pred_check_branch
      %20 = sbr.rel (0) target = $region21
    $region20: #{tpu_custom_call.1} parent=1 // pred_region
      _
    $region21: #{tpu_custom_call.1} parent=1 // pred_fallthru
      _
    %v21 = vld [vmem:[%s0] sm:$0x3]
    %v22 = vld [vmem:[%s1] sm:$0x3]
    %v23 = vld [vmem:[%s3] sm:$0x1f]
    %v24 = vld [vmem:[%s2] sm:$0x3]
    %26 = vset.pattern.permute.xlu0 0
    %27 = vperm.xlu0 %26, %v22
    %v28 = vpop.permute.xlu0 %27
    %v30 = vlaneseq
    %v31 = vshrl.u32 %v30, 7
    %v32 = vsub.s32 0, %v31
    %v33 = vrot.slane %v21, %v32
    %v34 = vmul.f32 %v28, %v33
    %36 = vset.pattern.permute.xlu0 0
    %37 = vperm.xlu0 %36, %v24
    %v38 = vpop.permute.xlu0 %37
    %v40 = vadd.f32 %v38, %v34
    %41 = vset.pattern.permute.xlu0 1
    %42 = vperm.xlu0 %41, %v22
    %v43 = vpop.permute.xlu0 %42
    %v45 = vlaneseq
    %v46 = vshrl.u32 %v45, 7
    %v47 = vsub.s32 1, %v46
    %v48 = vrot.slane %v21, %v47
    %v49 = vmul.f32 %v43, %v48
    %v50 = vadd.f32 %v40, %v49
    %v51 = vmax.f32 %v50, 0.0
    %v52 = vld [vmem:[%s4] sm:$0x1f]
    %54 = vset.pattern.permute.xlu0 0
    %55 = vperm.xlu0 %54, %v23
    %v56 = vpop.permute.xlu0 %55
    %v58 = vlaneseq
    %v59 = vshrl.u32 %v58, 7
    %v60 = vsub.s32 0, %v59
    %v61 = vrot.slane %v51, %v60
    %v62 = vmul.f32 %v56, %v61
    %64 = vset.pattern.permute.xlu0 0
    %65 = vperm.xlu0 %64, %v52
    %v66 = vpop.permute.xlu0 %65
    %v68 = vadd.f32 %v66, %v62
    %69 = vset.pattern.permute.xlu0 1
    %70 = vperm.xlu0 %69, %v23
    %v71 = vpop.permute.xlu0 %70
    %v73 = vlaneseq
    %v74 = vshrl.u32 %v73, 7
    %v75 = vsub.s32 1, %v74
    %v76 = vrot.slane %v51, %v75
    %v77 = vmul.f32 %v71, %v76
    %v78 = vadd.f32 %v68, %v77
    %79 = vst [vmem:[#allocation2] sm:$0x1f] %v78
    // Predicated region
    $region22: #{tpu_custom_call.1} parent=1 // pred_check
      _
    $region23: #{tpu_custom_call.1} parent=1 // pred_check_branch
      %81 = sbr.rel (0) target = $region25
    $region24: #{tpu_custom_call.1} parent=1 // pred_region
      %s83 = ssub.s32 128, 128
      %84 = vsyncadd [#allocation3], %s83
      %s86 = sshll.u32 [#allocation2], 4
      %s87 = int_to_ptr.vmem [resolvable:$true] %s86
      %89 = dma.vmem_to_hbm [thread:$0]  %s87, 128, %s5, [#allocation3]
    $region25: #{tpu_custom_call.1} parent=1 // pred_fallthru
      _
    // Predicated region
    $region26: #{tpu_custom_call.1} parent=1 // pred_check
      _
    $region27: #{tpu_custom_call.1} parent=1 // pred_check_branch
      %91 = sbr.rel (0) target = $region29
    $region28: #{tpu_custom_call.1} parent=1 // pred_region
      %92 = dma.done [#allocation3], 128
    $region29: #{tpu_custom_call.1} parent=1 // pred_fallthru
      _
    %93 = vsyncpa [#allocation3], 1

</llo_original>
